<compile_context>
chip_gen: v7x
topology: tpu7x:2x2x1
jax: 0.10.0
libtpu: 0.0.40
codegen_flags: <defaults>
</compile_context>

<pallas_src>
import jax
import jax.numpy as jnp
from jax.experimental import pallas as pl
from jax.experimental.pallas import tpu as pltpu

EPS = 1e-5
F_IN = 196
F_PAD = 256


# ----------------------------- kernel ----------------------------------------
def fnn_kernel(x_ref, w1_ref, w2_ref, wp_ref, bnp_ref, out_ref):
    bnp = bnp_ref[...]                                   # (10, 256) f32 param slab

    def bn_train(h, gamma, beta):
        # Training-mode BatchNorm1d, single pass: E[x], E[x^2].
        inv_n = 1.0 / h.shape[0]
        s = jnp.sum(h, axis=0, keepdims=True)
        ss = jnp.sum(h * h, axis=0, keepdims=True)
        mean = s * inv_n
        var = ss * inv_n - mean * mean                   # biased batch variance
        return (h - mean) * jax.lax.rsqrt(var + EPS) * gamma + beta

    def softmax(z):
        z = z - jnp.max(z, axis=1, keepdims=True)
        e = jnp.exp(z)
        return e * pl.reciprocal(jnp.sum(e, axis=1, keepdims=True), approx=True)

    def tower(i, g1, be1, g2, be2):
        # Linear(196->196), bias dropped (cancels under train-mode BN). bf16 MXU.
        h = jnp.dot(x_ref[i], w1_ref[i], preferred_element_type=jnp.float32)
        h = jnp.maximum(bn_train(h, g1, be1), 0.0)       # BN + ReLU (f32)
        # Linear(196->10): weight stored bf16 (HBM), compute in f32 (tiny).
        z = jnp.dot(h, w2_ref[i].astype(jnp.float32),
                    preferred_element_type=jnp.float32)
        return softmax(bn_train(z, g2, be2))

    d1 = tower(0, bnp[0:1, :], bnp[1:2, :], bnp[4:5, 0:10], bnp[5:6, 0:10])
    d2 = tower(1, bnp[2:3, :], bnp[3:4, :], bnp[6:7, 0:10], bnp[7:8, 0:10])

    d = jnp.concatenate([d1, d2], axis=1)                # (B, 20)  == torch.cat
    zp = jnp.dot(d, wp_ref[...], preferred_element_type=jnp.float32)   # (B, 2)
    zp = bn_train(zp, bnp[8:9, 0:2], bnp[9:10, 0:2])
    out_ref[...] = softmax(zp)                           # target


# ----------------------------- params -----------------------------------------
def _linear_params(key, in_f, out_f, w_dtype=jnp.float32):
    # PyTorch nn.Linear default init: U(-1/sqrt(in), 1/sqrt(in)).
    kw, kb = jax.random.split(key)
    bound = 1.0 / jnp.sqrt(jnp.float32(in_f))
    w = jax.random.uniform(kw, (out_f, in_f), jnp.float32, -bound, bound)
    b = jax.random.uniform(kb, (out_f,), jnp.float32, -bound, bound)
    return w.astype(w_dtype), b


def _bn_params(n):
    return jnp.ones((n,), jnp.float32), jnp.zeros((n,), jnp.float32)


def init_fnn_params(key):
    keys = jax.random.split(key, 5)
    params = {}
    for tag, (k1, k2) in (("a", keys[0:2]), ("b", keys[2:4])):
        w1, b1 = _linear_params(k1, 196, 196, w_dtype=jnp.bfloat16)  # bf16 weights
        g1, be1 = _bn_params(196)
        w2, b2 = _linear_params(k2, 196, 10, w_dtype=jnp.bfloat16)
        g2, be2 = _bn_params(10)
        params[tag] = (w1, b1, g1, be1, w2, b2, g2, be2)
    wp, bp = _linear_params(keys[4], 20, 2)              # predictor stays f32 (tiny)
    gp, bep = _bn_params(2)
    params["p"] = (wp, bp, gp, bep)
    return params


# ----------------------------- wrapper -----------------------------------------
def _pad_cols(a, n):
    return jnp.pad(a, [(0, 0)] * (a.ndim - 1) + [(0, n - a.shape[-1])])


def fnn_forward(params, im1, im2):
    B = im1.shape[0]

    # Inputs: flatten (B,1,14,14) -> (B,196), zero-pad to 256, bf16, stack towers.
    x1 = _pad_cols(im1.reshape(B, F_IN), F_PAD)
    x2 = _pad_cols(im2.reshape(B, F_IN), F_PAD)
    x = jnp.stack([x1, x2]).astype(jnp.bfloat16)                    # (2, B, 256)

    def tower_weights(tag):
        w1, _b1, g1, be1, w2, _b2, g2, be2 = params[tag]            # biases unused
        w1p = jnp.pad(w1.T, ((0, F_PAD - F_IN), (0, F_PAD - F_IN))) # (256,256) bf16
        w2p = jnp.pad(w2.T, ((0, F_PAD - F_IN), (0, 0)))            # (256, 10) bf16
        return w1p, w2p, g1, be1, g2, be2

    w1a, w2a, g1a, be1a, g2a, be2a = tower_weights("a")
    w1b, w2b, g1b, be1b, g2b, be2b = tower_weights("b")
    w1 = jnp.stack([w1a, w1b])                                      # (2,256,256) bf16
    w2 = jnp.stack([w2a, w2b])                                      # (2,256,10)  bf16

    wp, _bp, gp, bep = params["p"]
    wp_t = wp.T.astype(jnp.float32)                                 # (20, 2)

    # Pack all 10 tiny BN vectors into one (10,256) f32 slab (pad gamma/beta = 0).
    def row(v):
        return _pad_cols(v.astype(jnp.float32).reshape(1, -1), F_PAD)

    bnp = jnp.concatenate(
        [row(g1a), row(be1a), row(g1b), row(be1b),
         row(g2a), row(be2a), row(g2b), row(be2b),
         row(gp), row(bep)], axis=0)                                # (10, 256)

    vmem = pl.BlockSpec(memory_space=pltpu.MemorySpace.VMEM)
    target = pl.pallas_call(
        fnn_kernel,
        out_shape=jax.ShapeDtypeStruct((B, 2), jnp.float32),
        in_specs=[vmem] * 5,
        out_specs=vmem,
    )(x, w1, w2, wp_t, bnp)
    # forward returns (None, None, target)
    return None, None, target


# ----------------------------- reference (pure JAX, f32) ------------------------
def _ref_forward(params, im1, im2):
    hp = jax.lax.Precision.HIGHEST

    def bn(h, g, b):
        m = h.mean(0, keepdims=True)
        v = ((h - m) ** 2).mean(0, keepdims=True)
        return (h - m) / jnp.sqrt(v + EPS) * g + b

    def sm(z):
        z = z - z.max(1, keepdims=True)
        e = jnp.exp(z)
        return e / e.sum(1, keepdims=True)

    def branch(x, p):
        w1, b1, g1, be1, w2, b2, g2, be2 = p
        h = jnp.dot(x, w1.T.astype(jnp.float32), precision=hp) + b1
        h = jnp.maximum(bn(h, g1, be1), 0.0)
        z = jnp.dot(h, w2.T.astype(jnp.float32), precision=hp) + b2
        return sm(bn(z, g2, be2))

    x1 = im1.reshape(-1, F_IN).astype(jnp.float32)
    x2 = im2.reshape(-1, F_IN).astype(jnp.float32)
    d = jnp.concatenate([branch(x1, params["a"]), branch(x2, params["b"])], axis=1)
    wp, bp, gp, bep = params["p"]
    return sm(bn(jnp.dot(d, wp.T, precision=hp) + bp, gp, bep))


# ----------------------------- main ----------------------------------------------
if __name__ == "__main__":
    key = jax.random.PRNGKey(0)
    k_par, k_im1, k_im2 = jax.random.split(key, 3)

    params = init_fnn_params(k_par)
    B = 16  # multiple of the 8-row f32 sublane tile (and 16-row bf16 tile)
    im1 = jax.random.normal(k_im1, (B, 1, 14, 14), jnp.float32).astype(jnp.bfloat16)
    im2 = jax.random.normal(k_im2, (B, 1, 14, 14), jnp.float32).astype(jnp.bfloat16)

    _, _, target = fnn_forward(params, im1, im2)
    target = jax.block_until_ready(target)

    ref = _ref_forward(params, im1, im2)
    assert target.shape == (B, 2)
    assert bool(jnp.all(jnp.isfinite(target)))
    # Tolerance accounts for the approx softmax reciprocal and bias-free/one-pass
    # BN reassociation; outputs are 2-class probabilities so 5e-3 abs is strict.
    assert jnp.allclose(target, ref, atol=5e-3, rtol=0.0), (target, ref)

    print("KERNEL_OK")
</pallas_src>

<mosaic_0001>
module attributes {stable_mosaic.version = 11 : i64} {
  func.func @fnn_kernel(%arg0: memref<2x16x256xbf16, #tpu.memory_space<vmem>>, %arg1: memref<2x256x256xbf16, #tpu.memory_space<vmem>>, %arg2: memref<2x256x10xbf16, #tpu.memory_space<vmem>>, %arg3: memref<20x2xf32, #tpu.memory_space<vmem>>, %arg4: memref<10x256xf32, #tpu.memory_space<vmem>>, %arg5: memref<16x2xf32, #tpu.memory_space<vmem>>) attributes {dimension_semantics = [], scalar_prefetch = 0 : i64, scratch_operands = 0 : i64, tpu.core_type = #tpu.core_type<tc>} {
    %c0 = arith.constant 0 : index
    %c0_0 = arith.constant 0 : index
    %0 = vector.load %arg4[%c0, %c0_0] : memref<10x256xf32, #tpu.memory_space<vmem>>, vector<10x256xf32>
    %1 = vector.extract_strided_slice %0 {offsets = [0, 0], sizes = [1, 256], strides = [1, 1]} : vector<10x256xf32> to vector<1x256xf32>
    %2 = vector.extract_strided_slice %0 {offsets = [1, 0], sizes = [1, 256], strides = [1, 1]} : vector<10x256xf32> to vector<1x256xf32>
    %3 = vector.extract_strided_slice %0 {offsets = [4, 0], sizes = [1, 10], strides = [1, 1]} : vector<10x256xf32> to vector<1x10xf32>
    %4 = vector.extract_strided_slice %0 {offsets = [5, 0], sizes = [1, 10], strides = [1, 1]} : vector<10x256xf32> to vector<1x10xf32>
    %c0_1 = arith.constant 0 : index
    %c0_2 = arith.constant 0 : index
    %c0_3 = arith.constant 0 : index
    %5 = vector.load %arg0[%c0_1, %c0_2, %c0_3] : memref<2x16x256xbf16, #tpu.memory_space<vmem>>, vector<1x16x256xbf16>
    %6 = vector.shape_cast %5 : vector<1x16x256xbf16> to vector<16x256xbf16>
    %c0_4 = arith.constant 0 : index
    %c0_5 = arith.constant 0 : index
    %c0_6 = arith.constant 0 : index
    %7 = vector.load %arg1[%c0_4, %c0_5, %c0_6] : memref<2x256x256xbf16, #tpu.memory_space<vmem>>, vector<1x256x256xbf16>
    %8 = vector.shape_cast %7 : vector<1x256x256xbf16> to vector<256x256xbf16>
    %cst = arith.constant dense<0.000000e+00> : vector<16x256xf32>
    %9 = tpu.matmul %6, %8, %cst {dimension_numbers = #tpu.dot_dimension_numbers<[1], [0], [0], [1], [0, 0, 1, 1], [], []>} : vector<16x256xbf16>, vector<256x256xbf16>, vector<16x256xf32> -> vector<16x256xf32>
    %cst_7 = arith.constant dense<0.000000e+00> : vector<256xf32>
    %10 = vector.multi_reduction <add>, %9, %cst_7 [0] : vector<16x256xf32> to vector<256xf32>
    %11 = vector.shape_cast %10 : vector<256xf32> to vector<1x256xf32>
    %12 = arith.mulf %9, %9 : vector<16x256xf32>
    %cst_8 = arith.constant dense<0.000000e+00> : vector<256xf32>
    %13 = vector.multi_reduction <add>, %12, %cst_8 [0] : vector<16x256xf32> to vector<256xf32>
    %14 = vector.shape_cast %13 : vector<256xf32> to vector<1x256xf32>
    %cst_9 = arith.constant 6.250000e-02 : f32
    %15 = vector.broadcast %cst_9 : f32 to vector<1x256xf32>
    %16 = arith.mulf %11, %15 : vector<1x256xf32>
    %cst_10 = arith.constant 6.250000e-02 : f32
    %17 = vector.broadcast %cst_10 : f32 to vector<1x256xf32>
    %18 = arith.mulf %14, %17 : vector<1x256xf32>
    %19 = arith.mulf %16, %16 : vector<1x256xf32>
    %20 = arith.subf %18, %19 : vector<1x256xf32>
    %21 = vector.broadcast %16 : vector<1x256xf32> to vector<16x256xf32>
    %22 = arith.subf %9, %21 : vector<16x256xf32>
    %cst_11 = arith.constant 9.99999974E-6 : f32
    %23 = vector.broadcast %cst_11 : f32 to vector<1x256xf32>
    %24 = arith.addf %20, %23 : vector<1x256xf32>
    %25 = math.rsqrt %24 : vector<1x256xf32>
    %26 = vector.broadcast %25 : vector<1x256xf32> to vector<16x256xf32>
    %27 = arith.mulf %22, %26 : vector<16x256xf32>
    %28 = vector.broadcast %1 : vector<1x256xf32> to vector<16x256xf32>
    %29 = arith.mulf %27, %28 : vector<16x256xf32>
    %30 = vector.broadcast %2 : vector<1x256xf32> to vector<16x256xf32>
    %31 = arith.addf %29, %30 : vector<16x256xf32>
    %cst_12 = arith.constant 0.000000e+00 : f32
    %32 = vector.broadcast %cst_12 : f32 to vector<16x256xf32>
    %33 = arith.maximumf %31, %32 : vector<16x256xf32>
    %c0_13 = arith.constant 0 : index
    %c0_14 = arith.constant 0 : index
    %c0_15 = arith.constant 0 : index
    %34 = vector.load %arg2[%c0_13, %c0_14, %c0_15] : memref<2x256x10xbf16, #tpu.memory_space<vmem>>, vector<1x256x10xbf16>
    %35 = vector.shape_cast %34 : vector<1x256x10xbf16> to vector<256x10xbf16>
    %36 = arith.extf %35 : vector<256x10xbf16> to vector<256x10xf32>
    %cst_16 = arith.constant dense<0.000000e+00> : vector<16x10xf32>
    %37 = tpu.matmul %33, %36, %cst_16 {dimension_numbers = #tpu.dot_dimension_numbers<[1], [0], [0], [1], [0, 0, 1, 1], [], []>} : vector<16x256xf32>, vector<256x10xf32>, vector<16x10xf32> -> vector<16x10xf32>
    %cst_17 = arith.constant dense<0.000000e+00> : vector<10xf32>
    %38 = vector.multi_reduction <add>, %37, %cst_17 [0] : vector<16x10xf32> to vector<10xf32>
    %39 = vector.shape_cast %38 : vector<10xf32> to vector<1x10xf32>
    %40 = arith.mulf %37, %37 : vector<16x10xf32>
    %cst_18 = arith.constant dense<0.000000e+00> : vector<10xf32>
    %41 = vector.multi_reduction <add>, %40, %cst_18 [0] : vector<16x10xf32> to vector<10xf32>
    %42 = vector.shape_cast %41 : vector<10xf32> to vector<1x10xf32>
    %cst_19 = arith.constant 6.250000e-02 : f32
    %43 = vector.broadcast %cst_19 : f32 to vector<1x10xf32>
    %44 = arith.mulf %39, %43 : vector<1x10xf32>
    %cst_20 = arith.constant 6.250000e-02 : f32
    %45 = vector.broadcast %cst_20 : f32 to vector<1x10xf32>
    %46 = arith.mulf %42, %45 : vector<1x10xf32>
    %47 = arith.mulf %44, %44 : vector<1x10xf32>
    %48 = arith.subf %46, %47 : vector<1x10xf32>
    %49 = vector.broadcast %44 : vector<1x10xf32> to vector<16x10xf32>
    %50 = arith.subf %37, %49 : vector<16x10xf32>
    %cst_21 = arith.constant 9.99999974E-6 : f32
    %51 = vector.broadcast %cst_21 : f32 to vector<1x10xf32>
    %52 = arith.addf %48, %51 : vector<1x10xf32>
    %53 = math.rsqrt %52 : vector<1x10xf32>
    %54 = vector.broadcast %53 : vector<1x10xf32> to vector<16x10xf32>
    %55 = arith.mulf %50, %54 : vector<16x10xf32>
    %56 = vector.broadcast %3 : vector<1x10xf32> to vector<16x10xf32>
    %57 = arith.mulf %55, %56 : vector<16x10xf32>
    %58 = vector.broadcast %4 : vector<1x10xf32> to vector<16x10xf32>
    %59 = arith.addf %57, %58 : vector<16x10xf32>
    %cst_22 = arith.constant dense<0xFF800000> : vector<16xf32>
    %60 = vector.multi_reduction <maximumf>, %59, %cst_22 [1] : vector<16x10xf32> to vector<16xf32>
    %61 = vector.shape_cast %60 : vector<16xf32> to vector<16x1xf32>
    %62 = vector.broadcast %61 : vector<16x1xf32> to vector<16x10xf32>
    %63 = arith.subf %59, %62 : vector<16x10xf32>
    %64 = math.exp %63 : vector<16x10xf32>
    %cst_23 = arith.constant dense<0.000000e+00> : vector<16xf32>
    %65 = vector.multi_reduction <add>, %64, %cst_23 [1] : vector<16x10xf32> to vector<16xf32>
    %66 = vector.shape_cast %65 : vector<16xf32> to vector<16x1xf32>
    %67 = tpu.reciprocal %66 {approx = true} : vector<16x1xf32> -> vector<16x1xf32>
    %68 = vector.broadcast %67 : vector<16x1xf32> to vector<16x10xf32>
    %69 = arith.mulf %64, %68 : vector<16x10xf32>
    %70 = vector.extract_strided_slice %0 {offsets = [2, 0], sizes = [1, 256], strides = [1, 1]} : vector<10x256xf32> to vector<1x256xf32>
    %71 = vector.extract_strided_slice %0 {offsets = [3, 0], sizes = [1, 256], strides = [1, 1]} : vector<10x256xf32> to vector<1x256xf32>
    %72 = vector.extract_strided_slice %0 {offsets = [6, 0], sizes = [1, 10], strides = [1, 1]} : vector<10x256xf32> to vector<1x10xf32>
    %73 = vector.extract_strided_slice %0 {offsets = [7, 0], sizes = [1, 10], strides = [1, 1]} : vector<10x256xf32> to vector<1x10xf32>
    %c1 = arith.constant 1 : index
    %c0_24 = arith.constant 0 : index
    %c0_25 = arith.constant 0 : index
    %74 = vector.load %arg0[%c1, %c0_24, %c0_25] : memref<2x16x256xbf16, #tpu.memory_space<vmem>>, vector<1x16x256xbf16>
    %75 = vector.shape_cast %74 : vector<1x16x256xbf16> to vector<16x256xbf16>
    %c1_26 = arith.constant 1 : index
    %c0_27 = arith.constant 0 : index
    %c0_28 = arith.constant 0 : index
    %76 = vector.load %arg1[%c1_26, %c0_27, %c0_28] : memref<2x256x256xbf16, #tpu.memory_space<vmem>>, vector<1x256x256xbf16>
    %77 = vector.shape_cast %76 : vector<1x256x256xbf16> to vector<256x256xbf16>
    %cst_29 = arith.constant dense<0.000000e+00> : vector<16x256xf32>
    %78 = tpu.matmul %75, %77, %cst_29 {dimension_numbers = #tpu.dot_dimension_numbers<[1], [0], [0], [1], [0, 0, 1, 1], [], []>} : vector<16x256xbf16>, vector<256x256xbf16>, vector<16x256xf32> -> vector<16x256xf32>
    %cst_30 = arith.constant dense<0.000000e+00> : vector<256xf32>
    %79 = vector.multi_reduction <add>, %78, %cst_30 [0] : vector<16x256xf32> to vector<256xf32>
    %80 = vector.shape_cast %79 : vector<256xf32> to vector<1x256xf32>
    %81 = arith.mulf %78, %78 : vector<16x256xf32>
    %cst_31 = arith.constant dense<0.000000e+00> : vector<256xf32>
    %82 = vector.multi_reduction <add>, %81, %cst_31 [0] : vector<16x256xf32> to vector<256xf32>
    %83 = vector.shape_cast %82 : vector<256xf32> to vector<1x256xf32>
    %cst_32 = arith.constant 6.250000e-02 : f32
    %84 = vector.broadcast %cst_32 : f32 to vector<1x256xf32>
    %85 = arith.mulf %80, %84 : vector<1x256xf32>
    %cst_33 = arith.constant 6.250000e-02 : f32
    %86 = vector.broadcast %cst_33 : f32 to vector<1x256xf32>
    %87 = arith.mulf %83, %86 : vector<1x256xf32>
    %88 = arith.mulf %85, %85 : vector<1x256xf32>
    %89 = arith.subf %87, %88 : vector<1x256xf32>
    %90 = vector.broadcast %85 : vector<1x256xf32> to vector<16x256xf32>
    %91 = arith.subf %78, %90 : vector<16x256xf32>
    %cst_34 = arith.constant 9.99999974E-6 : f32
    %92 = vector.broadcast %cst_34 : f32 to vector<1x256xf32>
    %93 = arith.addf %89, %92 : vector<1x256xf32>
    %94 = math.rsqrt %93 : vector<1x256xf32>
    %95 = vector.broadcast %94 : vector<1x256xf32> to vector<16x256xf32>
    %96 = arith.mulf %91, %95 : vector<16x256xf32>
    %97 = vector.broadcast %70 : vector<1x256xf32> to vector<16x256xf32>
    %98 = arith.mulf %96, %97 : vector<16x256xf32>
    %99 = vector.broadcast %71 : vector<1x256xf32> to vector<16x256xf32>
    %100 = arith.addf %98, %99 : vector<16x256xf32>
    %cst_35 = arith.constant 0.000000e+00 : f32
    %101 = vector.broadcast %cst_35 : f32 to vector<16x256xf32>
    %102 = arith.maximumf %100, %101 : vector<16x256xf32>
    %c1_36 = arith.constant 1 : index
    %c0_37 = arith.constant 0 : index
    %c0_38 = arith.constant 0 : index
    %103 = vector.load %arg2[%c1_36, %c0_37, %c0_38] : memref<2x256x10xbf16, #tpu.memory_space<vmem>>, vector<1x256x10xbf16>
    %104 = vector.shape_cast %103 : vector<1x256x10xbf16> to vector<256x10xbf16>
    %105 = arith.extf %104 : vector<256x10xbf16> to vector<256x10xf32>
    %cst_39 = arith.constant dense<0.000000e+00> : vector<16x10xf32>
    %106 = tpu.matmul %102, %105, %cst_39 {dimension_numbers = #tpu.dot_dimension_numbers<[1], [0], [0], [1], [0, 0, 1, 1], [], []>} : vector<16x256xf32>, vector<256x10xf32>, vector<16x10xf32> -> vector<16x10xf32>
    %cst_40 = arith.constant dense<0.000000e+00> : vector<10xf32>
    %107 = vector.multi_reduction <add>, %106, %cst_40 [0] : vector<16x10xf32> to vector<10xf32>
    %108 = vector.shape_cast %107 : vector<10xf32> to vector<1x10xf32>
    %109 = arith.mulf %106, %106 : vector<16x10xf32>
    %cst_41 = arith.constant dense<0.000000e+00> : vector<10xf32>
    %110 = vector.multi_reduction <add>, %109, %cst_41 [0] : vector<16x10xf32> to vector<10xf32>
    %111 = vector.shape_cast %110 : vector<10xf32> to vector<1x10xf32>
    %cst_42 = arith.constant 6.250000e-02 : f32
    %112 = vector.broadcast %cst_42 : f32 to vector<1x10xf32>
    %113 = arith.mulf %108, %112 : vector<1x10xf32>
    %cst_43 = arith.constant 6.250000e-02 : f32
    %114 = vector.broadcast %cst_43 : f32 to vector<1x10xf32>
    %115 = arith.mulf %111, %114 : vector<1x10xf32>
    %116 = arith.mulf %113, %113 : vector<1x10xf32>
    %117 = arith.subf %115, %116 : vector<1x10xf32>
    %118 = vector.broadcast %113 : vector<1x10xf32> to vector<16x10xf32>
    %119 = arith.subf %106, %118 : vector<16x10xf32>
    %cst_44 = arith.constant 9.99999974E-6 : f32
    %120 = vector.broadcast %cst_44 : f32 to vector<1x10xf32>
    %121 = arith.addf %117, %120 : vector<1x10xf32>
    %122 = math.rsqrt %121 : vector<1x10xf32>
    %123 = vector.broadcast %122 : vector<1x10xf32> to vector<16x10xf32>
    %124 = arith.mulf %119, %123 : vector<16x10xf32>
    %125 = vector.broadcast %72 : vector<1x10xf32> to vector<16x10xf32>
    %126 = arith.mulf %124, %125 : vector<16x10xf32>
    %127 = vector.broadcast %73 : vector<1x10xf32> to vector<16x10xf32>
    %128 = arith.addf %126, %127 : vector<16x10xf32>
    %cst_45 = arith.constant dense<0xFF800000> : vector<16xf32>
    %129 = vector.multi_reduction <maximumf>, %128, %cst_45 [1] : vector<16x10xf32> to vector<16xf32>
    %130 = vector.shape_cast %129 : vector<16xf32> to vector<16x1xf32>
    %131 = vector.broadcast %130 : vector<16x1xf32> to vector<16x10xf32>
    %132 = arith.subf %128, %131 : vector<16x10xf32>
    %133 = math.exp %132 : vector<16x10xf32>
    %cst_46 = arith.constant dense<0.000000e+00> : vector<16xf32>
    %134 = vector.multi_reduction <add>, %133, %cst_46 [1] : vector<16x10xf32> to vector<16xf32>
    %135 = vector.shape_cast %134 : vector<16xf32> to vector<16x1xf32>
    %136 = tpu.reciprocal %135 {approx = true} : vector<16x1xf32> -> vector<16x1xf32>
    %137 = vector.broadcast %136 : vector<16x1xf32> to vector<16x10xf32>
    %138 = arith.mulf %133, %137 : vector<16x10xf32>
    %139 = tpu.concatenate %69, %138 in 1 : vector<16x10xf32>, vector<16x10xf32> -> vector<16x20xf32>
    %c0_47 = arith.constant 0 : index
    %c0_48 = arith.constant 0 : index
    %140 = vector.load %arg3[%c0_47, %c0_48] : memref<20x2xf32, #tpu.memory_space<vmem>>, vector<20x2xf32>
    %cst_49 = arith.constant dense<0.000000e+00> : vector<16x2xf32>
    %141 = tpu.matmul %139, %140, %cst_49 {dimension_numbers = #tpu.dot_dimension_numbers<[1], [0], [0], [1], [0, 0, 1, 1], [], []>} : vector<16x20xf32>, vector<20x2xf32>, vector<16x2xf32> -> vector<16x2xf32>
    %142 = vector.extract_strided_slice %0 {offsets = [8, 0], sizes = [1, 2], strides = [1, 1]} : vector<10x256xf32> to vector<1x2xf32>
    %143 = vector.extract_strided_slice %0 {offsets = [9, 0], sizes = [1, 2], strides = [1, 1]} : vector<10x256xf32> to vector<1x2xf32>
    %cst_50 = arith.constant dense<0.000000e+00> : vector<2xf32>
    %144 = vector.multi_reduction <add>, %141, %cst_50 [0] : vector<16x2xf32> to vector<2xf32>
    %145 = vector.shape_cast %144 : vector<2xf32> to vector<1x2xf32>
    %146 = arith.mulf %141, %141 : vector<16x2xf32>
    %cst_51 = arith.constant dense<0.000000e+00> : vector<2xf32>
    %147 = vector.multi_reduction <add>, %146, %cst_51 [0] : vector<16x2xf32> to vector<2xf32>
    %148 = vector.shape_cast %147 : vector<2xf32> to vector<1x2xf32>
    %cst_52 = arith.constant 6.250000e-02 : f32
    %149 = vector.broadcast %cst_52 : f32 to vector<1x2xf32>
    %150 = arith.mulf %145, %149 : vector<1x2xf32>
    %cst_53 = arith.constant 6.250000e-02 : f32
    %151 = vector.broadcast %cst_53 : f32 to vector<1x2xf32>
    %152 = arith.mulf %148, %151 : vector<1x2xf32>
    %153 = arith.mulf %150, %150 : vector<1x2xf32>
    %154 = arith.subf %152, %153 : vector<1x2xf32>
    %155 = vector.broadcast %150 : vector<1x2xf32> to vector<16x2xf32>
    %156 = arith.subf %141, %155 : vector<16x2xf32>
    %cst_54 = arith.constant 9.99999974E-6 : f32
    %157 = vector.broadcast %cst_54 : f32 to vector<1x2xf32>
    %158 = arith.addf %154, %157 : vector<1x2xf32>
    %159 = math.rsqrt %158 : vector<1x2xf32>
    %160 = vector.broadcast %159 : vector<1x2xf32> to vector<16x2xf32>
    %161 = arith.mulf %156, %160 : vector<16x2xf32>
    %162 = vector.broadcast %142 : vector<1x2xf32> to vector<16x2xf32>
    %163 = arith.mulf %161, %162 : vector<16x2xf32>
    %164 = vector.broadcast %143 : vector<1x2xf32> to vector<16x2xf32>
    %165 = arith.addf %163, %164 : vector<16x2xf32>
    %cst_55 = arith.constant dense<0xFF800000> : vector<16xf32>
    %166 = vector.multi_reduction <maximumf>, %165, %cst_55 [1] : vector<16x2xf32> to vector<16xf32>
    %167 = vector.shape_cast %166 : vector<16xf32> to vector<16x1xf32>
    %168 = vector.broadcast %167 : vector<16x1xf32> to vector<16x2xf32>
    %169 = arith.subf %165, %168 : vector<16x2xf32>
    %170 = math.exp %169 : vector<16x2xf32>
    %cst_56 = arith.constant dense<0.000000e+00> : vector<16xf32>
    %171 = vector.multi_reduction <add>, %170, %cst_56 [1] : vector<16x2xf32> to vector<16xf32>
    %172 = vector.shape_cast %171 : vector<16xf32> to vector<16x1xf32>
    %173 = tpu.reciprocal %172 {approx = true} : vector<16x1xf32> -> vector<16x1xf32>
    %174 = vector.broadcast %173 : vector<16x1xf32> to vector<16x2xf32>
    %175 = arith.mulf %170, %174 : vector<16x2xf32>
    %c0_57 = arith.constant 0 : index
    %c0_58 = arith.constant 0 : index
    %176 = vector.load %arg5[%c0_57, %c0_58] : memref<16x2xf32, #tpu.memory_space<vmem>>, vector<16x2xf32>
    tpu.vector_store %arg5[%c0_57, %c0_58], %175 {strides = array<i32>} : memref<16x2xf32, #tpu.memory_space<vmem>>, vector<16x2xf32>,
    return
  }
}

</mosaic_0001>

<llo_original>
// kernel: tpu_custom_call.1
$region0: #{tpu_custom_call.1}
  #allocation0 [shape = 'u32[]', space=smem, size = 0x4, offset = 0x4, fixed_abs, tag = 'smem constant byte address 0x4 - core index']
  #allocation1 [shape = 'u32[144,128]{1,0:T(1,128)}', space=vmem, size = 0x12000, scoped, tag = 'internal scratch']
  %s0 = inlined_call_operand.vmem [shape: bf16[2,16,256], index: 0, kind: input, shape index: {}]
  %s1 = inlined_call_operand.hbm [shape: bf16[2,256,256], index: 1, kind: input, shape index: {}]
  %s2 = inlined_call_operand.vmem [shape: bf16[2,256,10], index: 2, kind: input, shape index: {}]
  %s3 = inlined_call_operand.vmem [shape: f32[20,2], index: 3, kind: input, shape index: {}]
  %s4 = inlined_call_operand.vmem [shape: f32[10,256], index: 4, kind: input, shape index: {}]
  %s5 = inlined_call_operand.vmem [shape: f32[16,2], index: 5, kind: output, shape index: {}]
  %s6 = sld [smem:[#allocation0]]
  $region34: #{tpu_custom_call.1} parent=0
    _
  %s8 = ssub.s32 1, %s6
  %s9 = scalar_select 0, %s8, %s6
  $region1: #{tpu_custom_call.1} parent=0
    #allocation2 [shape = 'u8[262144]{0}', space=vmem, size = 0x40000, scoped, tag = 'input window, operand 1, single buffered']
    #allocation3 [shape = 's32[1]{0}', space=sflag, size = 0x4, scoped, tag = 'scoped memory for tpu_custom_call.1']
    %10 = vsyncpa [#allocation3], 0
    // Predicated region
    $region2: #{tpu_custom_call.1} parent=1 // pred_check
      _
    $region3: #{tpu_custom_call.1} parent=1 // pred_check_branch
      %12 = sbr.rel (0) target = $region5
    $region4: #{tpu_custom_call.1} parent=1 // pred_region
      _
    $region5: #{tpu_custom_call.1} parent=1 // pred_fallthru
      _
    // Predicated region
    $region6: #{tpu_custom_call.1} parent=1 // pred_check
      _
    $region7: #{tpu_custom_call.1} parent=1 // pred_check_branch
      %14 = sbr.rel (0) target = $region9
    $region8: #{tpu_custom_call.1} parent=1 // pred_region
      %s16 = ssub.s32 8192, 8192
      %17 = vsyncadd [#allocation3], %s16
      %s18 = sshll.u32 [#allocation2], 4
      %s19 = int_to_ptr.vmem [resolvable:$true] %s18
      %24 = dma.hbm_to_vmem [thread:$0]  %s1, 8192, %s19, [#allocation3], 128, 128, 8
    $region9: #{tpu_custom_call.1} parent=1 // pred_fallthru
      _
    // Predicated region
    $region10: #{tpu_custom_call.1} parent=1 // pred_check
      _
    $region11: #{tpu_custom_call.1} parent=1 // pred_check_branch
      %26 = sbr.rel (0) target = $region13
    $region12: #{tpu_custom_call.1} parent=1 // pred_region
      _
    $region13: #{tpu_custom_call.1} parent=1 // pred_fallthru
      _
    // Predicated region
    $region14: #{tpu_custom_call.1} parent=1 // pred_check
      _
    $region15: #{tpu_custom_call.1} parent=1 // pred_check_branch
      %28 = sbr.rel (0) target = $region17
    $region16: #{tpu_custom_call.1} parent=1 // pred_region
      _
    $region17: #{tpu_custom_call.1} parent=1 // pred_fallthru
      _
    // Predicated region
    $region18: #{tpu_custom_call.1} parent=1 // pred_check
      _
    $region19: #{tpu_custom_call.1} parent=1 // pred_check_branch
      %30 = sbr.rel (0) target = $region21
    $region20: #{tpu_custom_call.1} parent=1 // pred_region
      _
    $region21: #{tpu_custom_call.1} parent=1 // pred_fallthru
      _
    // Predicated region
    $region22: #{tpu_custom_call.1} parent=1 // pred_check
      _
    $region23: #{tpu_custom_call.1} parent=1 // pred_check_branch
      %32 = sbr.rel (0) target = $region25
    $region24: #{tpu_custom_call.1} parent=1 // pred_region
      %33 = dma.done [#allocation3], 8192
    $region25: #{tpu_custom_call.1} parent=1 // pred_fallthru
      _
    %v34 = vld [vmem:[%s4] sm:$0xff]
    %v35 = vld [vmem:[%s4 + $0x8] sm:$0xff]
    %v36 = vld [vmem:[%s4 + $0x10] sm:$0x3]
    %v37 = vld [vmem:[%s0] sm:$0xff]
    %v38 = vld [vmem:[%s0 + $0x8] sm:$0xff]
    %v39 = vld [vmem:[#allocation2] sm:$0xff]
    %v40 = vld [vmem:[#allocation2 + $0x8] sm:$0xff]
    %v41 = vld [vmem:[#allocation2 + $0x10] sm:$0xff]
    %v42 = vld [vmem:[#allocation2 + $0x18] sm:$0xff]
    %v43 = vld [vmem:[#allocation2 + $0x20] sm:$0xff]
    %v44 = vld [vmem:[#allocation2 + $0x28] sm:$0xff]
    %v45 = vld [vmem:[#allocation2 + $0x30] sm:$0xff]
    %v46 = vld [vmem:[#allocation2 + $0x38] sm:$0xff]
    %v47 = vld [vmem:[#allocation2 + $0x40] sm:$0xff]
    %v48 = vld [vmem:[#allocation2 + $0x48] sm:$0xff]
    %v49 = vld [vmem:[#allocation2 + $0x50] sm:$0xff]
    %v50 = vld [vmem:[#allocation2 + $0x58] sm:$0xff]
    %v51 = vld [vmem:[#allocation2 + $0x60] sm:$0xff]
    %v52 = vld [vmem:[#allocation2 + $0x68] sm:$0xff]
    %v53 = vld [vmem:[#allocation2 + $0x70] sm:$0xff]
    %v54 = vld [vmem:[#allocation2 + $0x78] sm:$0xff]
    %v55 = vld [vmem:[#allocation2 + $0x80] sm:$0xff]
    %v56 = vld [vmem:[#allocation2 + $0x88] sm:$0xff]
    %v57 = vld [vmem:[#allocation2 + $0x90] sm:$0xff]
    %v58 = vld [vmem:[#allocation2 + $0x98] sm:$0xff]
    %v59 = vld [vmem:[#allocation2 + $0xa0] sm:$0xff]
    %v60 = vld [vmem:[#allocation2 + $0xa8] sm:$0xff]
    %v61 = vld [vmem:[#allocation2 + $0xb0] sm:$0xff]
    %v62 = vld [vmem:[#allocation2 + $0xb8] sm:$0xff]
    %v63 = vld [vmem:[#allocation2 + $0xc0] sm:$0xff]
    %v64 = vld [vmem:[#allocation2 + $0xc8] sm:$0xff]
    %v65 = vld [vmem:[#allocation2 + $0xd0] sm:$0xff]
    %v66 = vld [vmem:[#allocation2 + $0xd8] sm:$0xff]
    %v67 = vld [vmem:[#allocation2 + $0xe0] sm:$0xff]
    %v68 = vld [vmem:[#allocation2 + $0xe8] sm:$0xff]
    %v69 = vld [vmem:[#allocation2 + $0xf0] sm:$0xff]
    %v70 = vld [vmem:[#allocation2 + $0xf8] sm:$0xff]
    %v73 = vunpack.c.l.b16 %v37
    %v74 = vunpack.c.h.b16 %v37
    %v75 = vunpack.c.l.b16 %v38
    %v76 = vunpack.c.h.b16 %v38
    %v77 = vpack.c.b16 %v75, %v73
    %v78 = vpack.c.b16 %v76, %v74
    %v113 = vunpack.c.l.b16 %v39
    %v114 = vunpack.c.h.b16 %v39
    %v115 = vunpack.c.l.b16 %v40
    %v116 = vunpack.c.h.b16 %v40
    %v117 = vunpack.c.l.b16 %v41
    %v118 = vunpack.c.h.b16 %v41
    %v119 = vunpack.c.l.b16 %v42
    %v120 = vunpack.c.h.b16 %v42
    %v121 = vunpack.c.l.b16 %v43
    %v122 = vunpack.c.h.b16 %v43
    %v123 = vunpack.c.l.b16 %v44
    %v124 = vunpack.c.h.b16 %v44
    %v125 = vunpack.c.l.b16 %v45
    %v126 = vunpack.c.h.b16 %v45
    %v127 = vunpack.c.l.b16 %v46
    %v128 = vunpack.c.h.b16 %v46
    %v129 = vunpack.c.l.b16 %v47
    %v130 = vunpack.c.h.b16 %v47
    %v131 = vunpack.c.l.b16 %v48
    %v132 = vunpack.c.h.b16 %v48
    %v133 = vunpack.c.l.b16 %v49
    %v134 = vunpack.c.h.b16 %v49
    %v135 = vunpack.c.l.b16 %v50
    %v136 = vunpack.c.h.b16 %v50
    %v137 = vunpack.c.l.b16 %v51
    %v138 = vunpack.c.h.b16 %v51
    %v139 = vunpack.c.l.b16 %v52
    %v140 = vunpack.c.h.b16 %v52
    %v141 = vunpack.c.l.b16 %v53
    %v142 = vunpack.c.h.b16 %v53
    %v143 = vunpack.c.l.b16 %v54
    %v144 = vunpack.c.h.b16 %v54
    %v145 = vunpack.c.l.b16 %v55
    %v146 = vunpack.c.h.b16 %v55
    %v147 = vunpack.c.l.b16 %v56
    %v148 = vunpack.c.h.b16 %v56
    %v149 = vunpack.c.l.b16 %v57
    %v150 = vunpack.c.h.b16 %v57
    %v151 = vunpack.c.l.b16 %v58
    %v152 = vunpack.c.h.b16 %v58
    %v153 = vunpack.c.l.b16 %v59
    %v154 = vunpack.c.h.b16 %v59
    %v155 = vunpack.c.l.b16 %v60
    %v156 = vunpack.c.h.b16 %v60
    %v157 = vunpack.c.l.b16 %v61
    %v158 = vunpack.c.h.b16 %v61
    %v159 = vunpack.c.l.b16 %v62
    %v160 = vunpack.c.h.b16 %v62
    %v161 = vunpack.c.l.b16 %v63
    %v162 = vunpack.c.h.b16 %v63
    %v163 = vunpack.c.l.b16 %v64
    %v164 = vunpack.c.h.b16 %v64
    %v165 = vunpack.c.l.b16 %v65
    %v166 = vunpack.c.h.b16 %v65
    %v167 = vunpack.c.l.b16 %v66
    %v168 = vunpack.c.h.b16 %v66
    %v169 = vunpack.c.l.b16 %v67
    %v170 = vunpack.c.h.b16 %v67
    %v171 = vunpack.c.l.b16 %v68
    %v172 = vunpack.c.h.b16 %v68
    %v173 = vunpack.c.l.b16 %v69
    %v174 = vunpack.c.h.b16 %v69
    %v175 = vunpack.c.l.b16 %v70
    %v176 = vunpack.c.h.b16 %v70
    %v177 = vpack.c.b16 %v115, %v113
    %v178 = vpack.c.b16 %v116, %v114
    %v179 = vpack.c.b16 %v119, %v117
    %v180 = vpack.c.b16 %v120, %v118
    %v181 = vpack.c.b16 %v123, %v121
    %v182 = vpack.c.b16 %v124, %v122
    %v183 = vpack.c.b16 %v127, %v125
    %v184 = vpack.c.b16 %v128, %v126
    %v185 = vpack.c.b16 %v131, %v129
    %v186 = vpack.c.b16 %v132, %v130
    %v187 = vpack.c.b16 %v135, %v133
    %v188 = vpack.c.b16 %v136, %v134
    %v189 = vpack.c.b16 %v139, %v137
    %v190 = vpack.c.b16 %v140, %v138
    %v191 = vpack.c.b16 %v143, %v141
    %v192 = vpack.c.b16 %v144, %v142
    %v193 = vpack.c.b16 %v147, %v145
    %v194 = vpack.c.b16 %v148, %v146
    %v195 = vpack.c.b16 %v151, %v149
    %v196 = vpack.c.b16 %v152, %v150
    %v197 = vpack.c.b16 %v155, %v153
    %v198 = vpack.c.b16 %v156, %v154
    %v199 = vpack.c.b16 %v159, %v157
    %v200 = vpack.c.b16 %v160, %v158
    %v201 = vpack.c.b16 %v163, %v161
    %v202 = vpack.c.b16 %v164, %v162
    %v203 = vpack.c.b16 %v167, %v165
    %v204 = vpack.c.b16 %v168, %v166
    %v205 = vpack.c.b16 %v171, %v169
    %v206 = vpack.c.b16 %v172, %v170
    %v207 = vpack.c.b16 %v175, %v173
    %v208 = vpack.c.b16 %v176, %v174
    %241 = vmatprep.subr.bf16.mxu0 %v178
    %242 = vmatpush1.bf16.msra.mxu0 %v177
    %243 = vmatprep.subr.bf16.mxu0 %v180
    %244 = vmatpush1.bf16.msra.mxu0 %v179
    %245 = vmatprep.subr.bf16.mxu0 %v182
    %246 = vmatpush1.bf16.msra.mxu0 %v181
    %247 = vmatprep.subr.bf16.mxu0 %v184
    %248 = vmatpush1.bf16.msra.mxu0 %v183
    %249 = vmatprep.subr.bf16.mxu0 %v186
    %250 = vmatpush1.bf16.msra.mxu0 %v185
    %251 = vmatprep.subr.bf16.mxu0 %v188
    %252 = vmatpush1.bf16.msra.mxu0 %v187
    %253 = vmatprep.subr.bf16.mxu0 %v190
    %254 = vmatpush1.bf16.msra.mxu0 %v189
    %255 = vmatprep.subr.bf16.mxu0 %v192
    %256 = vmatpush1.bf16.msra.mxu0 %v191
    %257 = vmatprep.subr.bf16.mxu0 %v194
    %258 = vmatpush1.bf16.msra.mxu0 %v193
    %259 = vmatprep.subr.bf16.mxu0 %v196
    %260 = vmatpush1.bf16.msra.mxu0 %v195
    %261 = vmatprep.subr.bf16.mxu0 %v198
    %262 = vmatpush1.bf16.msra.mxu0 %v197
    %263 = vmatprep.subr.bf16.mxu0 %v200
    %264 = vmatpush1.bf16.msra.mxu0 %v199
    %265 = vmatprep.subr.bf16.mxu0 %v202
    %266 = vmatpush1.bf16.msra.mxu0 %v201
    %267 = vmatprep.subr.bf16.mxu0 %v204
    %268 = vmatpush1.bf16.msra.mxu0 %v203
    %269 = vmatprep.subr.bf16.mxu0 %v206
    %270 = vmatpush1.bf16.msra.mxu0 %v205
    %271 = vmatprep.subr.bf16.mxu0 %v208
    %272 = vmatpush1.bf16.msra.mxu0 %v207
    %273 = vmatprep.mubr.bf16.mxu0 %v78
    %274 = vmatmul.mubr.bf16.gmra.mrb[0].mxu0 %v77
    %v275 = vpop.f32.mrb[0].mxu0
    %v276 = vadd.f32 0.0, %v275
    %v277 = vpop.f32.mrb[0].mxu0
    %v278 = vadd.f32 0.0, %v277
    %v279 = vpop.f32.mrb[0].mxu0
    %v280 = vadd.f32 0.0, %v279
    %v281 = vpop.f32.mrb[0].mxu0
    %v282 = vadd.f32 0.0, %v281
    %283 = vdwg.mxu0
    %v284 = vadd.f32 %v276, %v280
    %v285 = vrot.slane %v284, 4
    %v286 = vadd.f32 %v284, %v285
    %v287 = vrot.slane %v286, 2
    %v288 = vadd.f32 %v286, %v287
    %v289 = vrot.slane %v288, 1
    %v290 = vadd.f32 %v288, %v289
    %v291 = vadd.f32 %v278, %v282
    %v292 = vrot.slane %v291, 4
    %v293 = vadd.f32 %v291, %v292
    %v294 = vrot.slane %v293, 2
    %v295 = vadd.f32 %v293, %v294
    %v296 = vrot.slane %v295, 1
    %v297 = vadd.f32 %v295, %v296
    %v298 = vmul.f32 %v276, %v276
    %v299 = vmul.f32 %v278, %v278
    %v300 = vmul.f32 %v280, %v280
    %v301 = vmul.f32 %v282, %v282
    %v302 = vadd.f32 %v298, %v300
    %v303 = vrot.slane %v302, 4
    %v304 = vadd.f32 %v302, %v303
    %v305 = vrot.slane %v304, 2
    %v306 = vadd.f32 %v304, %v305
    %v307 = vrot.slane %v306, 1
    %v308 = vadd.f32 %v306, %v307
    %v309 = vadd.f32 %v299, %v301
    %v310 = vrot.slane %v309, 4
    %v311 = vadd.f32 %v309, %v310
    %v312 = vrot.slane %v311, 2
    %v313 = vadd.f32 %v311, %v312
    %v314 = vrot.slane %v313, 1
    %v315 = vadd.f32 %v313, %v314
    %v316 = vmul.f32 %v290, 0.0625
    %v317 = vmul.f32 %v297, 0.0625
    %v318 = vmul.f32 %v308, 0.0625
    %v319 = vmul.f32 %v315, 0.0625
    %v320 = vmul.f32 %v316, %v316
    %v321 = vmul.f32 %v317, %v317
    %v322 = vsub.f32 %v318, %v320
    %v323 = vsub.f32 %v319, %v321
    %v324 = vsub.f32 %v276, %v316
    %v325 = vsub.f32 %v278, %v317
    %v326 = vsub.f32 %v280, %v316
    %v327 = vsub.f32 %v282, %v317
    %v328 = vadd.f32 %v322, 1e-05
    %v329 = vadd.f32 %v323, 1e-05
    %v330 = vrsqrt.pop %v328
    %v331 = vrsqrt.pop %v329
    %v332 = vmul.f32 %v324, %v330
    %v333 = vmul.f32 %v325, %v331
    %v334 = vmul.f32 %v326, %v330
    %v335 = vmul.f32 %v327, %v331
    %v336 = vlaneseq
    %v337 = vshrl.u32 %v336, 7
    %v338 = vsub.s32 0, %v337
    %v339 = vrot.slane %v34, %v338
    %v340 = vlaneseq
    %v341 = vshrl.u32 %v340, 7
    %v342 = vsub.s32 0, %v341
    %v343 = vrot.slane %v35, %v342
    %v344 = vmul.f32 %v332, %v339
    %v345 = vmul.f32 %v333, %v343
    %v346 = vmul.f32 %v334, %v339
    %v347 = vmul.f32 %v335, %v343
    %v348 = vlaneseq
    %v349 = vshrl.u32 %v348, 7
    %v350 = vsub.s32 1, %v349
    %v351 = vrot.slane %v34, %v350
    %v352 = vlaneseq
    %v353 = vshrl.u32 %v352, 7
    %v354 = vsub.s32 1, %v353
    %v355 = vrot.slane %v35, %v354
    %v356 = vadd.f32 %v344, %v351
    %v357 = vadd.f32 %v345, %v355
    %v358 = vadd.f32 %v346, %v351
    %v359 = vadd.f32 %v347, %v355
    %v360 = vmax.f32 %v356, 0.0
    %v361 = vmax.f32 %v357, 0.0
    %v362 = vmax.f32 %v358, 0.0
    %v363 = vmax.f32 %v359, 0.0
    %v364 = vld [vmem:[%s2] sm:$0xf]
    %v365 = vld [vmem:[%s2 + $0x4] sm:$0xf]
    %v366 = vld [vmem:[%s2 + $0x8] sm:$0xf]
    %v367 = vld [vmem:[%s2 + $0xc] sm:$0xf]
    %v368 = vld [vmem:[%s2 + $0x10] sm:$0xf]
    %v369 = vld [vmem:[%s2 + $0x14] sm:$0xf]
    %v370 = vld [vmem:[%s2 + $0x18] sm:$0xf]
    %v371 = vld [vmem:[%s2 + $0x1c] sm:$0xf]
    %v372 = vld [vmem:[%s2 + $0x20] sm:$0xf]
    %v373 = vld [vmem:[%s2 + $0x24] sm:$0xf]
    %v374 = vld [vmem:[%s2 + $0x28] sm:$0xf]
    %v375 = vld [vmem:[%s2 + $0x2c] sm:$0xf]
    %v376 = vld [vmem:[%s2 + $0x30] sm:$0xf]
    %v377 = vld [vmem:[%s2 + $0x34] sm:$0xf]
    %v378 = vld [vmem:[%s2 + $0x38] sm:$0xf]
    %v379 = vld [vmem:[%s2 + $0x3c] sm:$0xf]
    %v380 = vld [vmem:[%s2 + $0x40] sm:$0xf]
    %v381 = vld [vmem:[%s2 + $0x44] sm:$0xf]
    %v382 = vld [vmem:[%s2 + $0x48] sm:$0xf]
    %v383 = vld [vmem:[%s2 + $0x4c] sm:$0xf]
    %v384 = vld [vmem:[%s2 + $0x50] sm:$0xf]
    %v385 = vld [vmem:[%s2 + $0x54] sm:$0xf]
    %v386 = vld [vmem:[%s2 + $0x58] sm:$0xf]
    %v387 = vld [vmem:[%s2 + $0x5c] sm:$0xf]
    %v388 = vld [vmem:[%s2 + $0x60] sm:$0xf]
    %v389 = vld [vmem:[%s2 + $0x64] sm:$0xf]
    %v390 = vld [vmem:[%s2 + $0x68] sm:$0xf]
    %v391 = vld [vmem:[%s2 + $0x6c] sm:$0xf]
    %v392 = vld [vmem:[%s2 + $0x70] sm:$0xf]
    %v393 = vld [vmem:[%s2 + $0x74] sm:$0xf]
    %v394 = vld [vmem:[%s2 + $0x78] sm:$0xf]
    %v395 = vld [vmem:[%s2 + $0x7c] sm:$0xf]
    %v396 = vunpack.c.l.bf16 %v364
    %v397 = vunpack.c.l.bf16 %v365
    %v398 = vunpack.c.l.bf16 %v366
    %v399 = vunpack.c.l.bf16 %v367
    %v400 = vunpack.c.l.bf16 %v368
    %v401 = vunpack.c.l.bf16 %v369
    %v402 = vunpack.c.l.bf16 %v370
    %v403 = vunpack.c.l.bf16 %v371
    %v404 = vunpack.c.l.bf16 %v372
    %v405 = vunpack.c.l.bf16 %v373
    %v406 = vunpack.c.l.bf16 %v374
    %v407 = vunpack.c.l.bf16 %v375
    %v408 = vunpack.c.l.bf16 %v376
    %v409 = vunpack.c.l.bf16 %v377
    %v410 = vunpack.c.l.bf16 %v378
    %v411 = vunpack.c.l.bf16 %v379
    %v412 = vunpack.c.l.bf16 %v380
    %v413 = vunpack.c.l.bf16 %v381
    %v414 = vunpack.c.l.bf16 %v382
    %v415 = vunpack.c.l.bf16 %v383
    %v416 = vunpack.c.l.bf16 %v384
    %v417 = vunpack.c.l.bf16 %v385
    %v418 = vunpack.c.l.bf16 %v386
    %v419 = vunpack.c.l.bf16 %v387
    %v420 = vunpack.c.l.bf16 %v388
    %v421 = vunpack.c.l.bf16 %v389
    %v422 = vunpack.c.l.bf16 %v390
    %v423 = vunpack.c.l.bf16 %v391
    %v424 = vunpack.c.l.bf16 %v392
    %v425 = vunpack.c.l.bf16 %v393
    %v426 = vunpack.c.l.bf16 %v394
    %v427 = vunpack.c.l.bf16 %v395
    %428 = vmatprep.subr.mxu0 0.0
    %429 = vmatpush1.msra.mxu0 %v396
    %430 = vmatprep.subr.mxu0 0.0
    %431 = vmatpush1.msra.mxu0 %v397
    %432 = vmatprep.subr.mxu0 0.0
    %433 = vmatpush1.msra.mxu0 %v398
    %434 = vmatprep.subr.mxu0 0.0
    %435 = vmatpush1.msra.mxu0 %v399
    %436 = vmatprep.subr.mxu0 0.0
    %437 = vmatpush1.msra.mxu0 %v400
    %438 = vmatprep.subr.mxu0 0.0
    %439 = vmatpush1.msra.mxu0 %v401
    %440 = vmatprep.subr.mxu0 0.0
    %441 = vmatpush1.msra.mxu0 %v402
    %442 = vmatprep.subr.mxu0 0.0
    %443 = vmatpush1.msra.mxu0 %v403
    %444 = vmatprep.subr.mxu0 0.0
    %445 = vmatpush1.msra.mxu0 %v404
    %446 = vmatprep.subr.mxu0 0.0
    %447 = vmatpush1.msra.mxu0 %v405
    %448 = vmatprep.subr.mxu0 0.0
    %449 = vmatpush1.msra.mxu0 %v406
    %450 = vmatprep.subr.mxu0 0.0
    %451 = vmatpush1.msra.mxu0 %v407
    %452 = vmatprep.subr.mxu0 0.0
    %453 = vmatpush1.msra.mxu0 %v408
    %454 = vmatprep.subr.mxu0 0.0
    %455 = vmatpush1.msra.mxu0 %v409
    %456 = vmatprep.subr.mxu0 0.0
    %457 = vmatpush1.msra.mxu0 %v410
    %458 = vmatprep.subr.mxu0 0.0
    %459 = vmatpush1.msra.mxu0 %v411
    %460 = vmatprep.subr.mxu0 0.0
    %461 = vmatpush1.msra.mxu0 %v412
    %462 = vmatprep.subr.mxu0 0.0
    %463 = vmatpush1.msra.mxu0 %v413
    %464 = vmatprep.subr.mxu0 0.0
    %465 = vmatpush1.msra.mxu0 %v414
    %466 = vmatprep.subr.mxu0 0.0
    %467 = vmatpush1.msra.mxu0 %v415
    %468 = vmatprep.subr.mxu0 0.0
    %469 = vmatpush1.msra.mxu0 %v416
    %470 = vmatprep.subr.mxu0 0.0
    %471 = vmatpush1.msra.mxu0 %v417
    %472 = vmatprep.subr.mxu0 0.0
    %473 = vmatpush1.msra.mxu0 %v418
    %474 = vmatprep.subr.mxu0 0.0
    %475 = vmatpush1.msra.mxu0 %v419
    %476 = vmatprep.subr.mxu0 0.0
    %477 = vmatpush1.msra.mxu0 %v420
    %478 = vmatprep.subr.mxu0 0.0
    %479 = vmatpush1.msra.mxu0 %v421
    %480 = vmatprep.subr.mxu0 0.0
    %481 = vmatpush1.msra.mxu0 %v422
    %482 = vmatprep.subr.mxu0 0.0
    %483 = vmatpush1.msra.mxu0 %v423
    %484 = vmatprep.subr.mxu0 0.0
    %485 = vmatpush1.msra.mxu0 %v424
    %486 = vmatprep.subr.mxu0 0.0
    %487 = vmatpush1.msra.mxu0 %v425
    %488 = vmatprep.subr.mxu0 0.0
    %489 = vmatpush1.msra.mxu0 %v426
    %490 = vmatprep.subr.mxu0 0.0
    %491 = vmatpush1.msra.mxu0 %v427
    %492 = vmatprep.mubr.f32.mxu0 %v361
    %493 = vmatmul.mubr.f32.gmra.mrb[0].mxu0 %v360
    %v494 = vpop.f32.mrb[0].mxu0
    %v495 = vadd.f32 0.0, %v494
    %v496 = vpop.f32.mrb[0].mxu0
    %497 = vmatprep.mubr.f32.mxu0 %v363
    %498 = vmatmul.mubr.f32.gmra.mrb[0].mxu0 %v362
    %v499 = vpop.f32.mrb[0].mxu0
    %v500 = vadd.f32 0.0, %v499
    %v501 = vpop.f32.mrb[0].mxu0
    %502 = vdwg.mxu0
    %vm503 = vcmask 80896
    %v504 = vsel %vm503, %v495, 0.0
    %v505 = vsel %vm503, %v500, 0.0
    %v506 = vadd.f32 %v504, %v505
    %v507 = vrot.slane %v506, 4
    %v508 = vadd.f32 %v506, %v507
    %v509 = vrot.slane %v508, 2
    %v510 = vadd.f32 %v508, %v509
    %v511 = vrot.slane %v510, 1
    %v512 = vadd.f32 %v510, %v511
    %v513 = vmul.f32 %v495, %v495
    %v514 = vmul.f32 %v500, %v500
    %v515 = vsel %vm503, %v513, 0.0
    %v516 = vsel %vm503, %v514, 0.0
    %v517 = vadd.f32 %v515, %v516
    %v518 = vrot.slane %v517, 4
    %v519 = vadd.f32 %v517, %v518
    %v520 = vrot.slane %v519, 2
    %v521 = vadd.f32 %v519, %v520
    %v522 = vrot.slane %v521, 1
    %v523 = vadd.f32 %v521, %v522
    %v524 = vmul.f32 %v512, 0.0625
    %v525 = vmul.f32 %v523, 0.0625
    %v526 = vmul.f32 %v524, %v524
    %v527 = vsub.f32 %v525, %v526
    %v528 = vsub.f32 %v495, %v524
    %v529 = vsub.f32 %v500, %v524
    %v530 = vadd.f32 %v527, 1e-05
    %v531 = vrsqrt.pop %v530
    %v532 = vmul.f32 %v528, %v531
    %v533 = vmul.f32 %v529, %v531
    %v534 = vlaneseq
    %v535 = vshrl.u32 %v534, 7
    %v536 = vsub.s32 4, %v535
    %v537 = vrot.slane %v34, %v536
    %v538 = vmul.f32 %v532, %v537
    %v539 = vmul.f32 %v533, %v537
    %v540 = vlaneseq
    %v541 = vshrl.u32 %v540, 7
    %v542 = vsub.s32 5, %v541
    %v543 = vrot.slane %v34, %v542
    %v544 = vadd.f32 %v538, %v543
    %v545 = vadd.f32 %v539, %v543
    %v546 = vsel %vm503, %v544, -inf
    %547 = vmax.xlane.f32.xlu0 %v546
    %v548 = vpop.xlane.xlu0 %547
    %v549 = vsel %vm503, %v545, -inf
    %550 = vmax.xlane.f32.xlu0 %v549
    %v551 = vpop.xlane.xlu0 %550
    %v552 = vsub.f32 %v544, %v548
    %v553 = vsub.f32 %v545, %v551
    %v554 = vmul.f32 %v552, 1.442695
    %v555 = vpow.pop %v554
    %v556 = vmul.f32 %v553, 1.442695
    %v557 = vpow.pop %v556
    %v558 = vsel %vm503, %v555, 0.0
    %559 = vadd.xlane.f32.xlu0 %v558
    %v560 = vpop.xlane.xlu0 %559
    %v561 = vsel %vm503, %v557, 0.0
    %562 = vadd.xlane.f32.xlu0 %v561
    %v563 = vpop.xlane.xlu0 %562
    %v564 = vrcp.pop %v560
    %v565 = vrcp.pop %v563
    %v566 = vmul.f32 %v555, %v564
    %v567 = vmul.f32 %v557, %v565
    %s568 = scalar_lea.vmem %s0, 16
    %v569 = vld [vmem:[%s568] sm:$0xff]
    %v570 = vld [vmem:[%s568 + $0x8] sm:$0xff]
    %s571 = scalar_lea.vmem [#allocation2], 256
    %v572 = vld [vmem:[%s571] sm:$0xff]
    %v573 = vld [vmem:[%s571 + $0x8] sm:$0xff]
    %v574 = vld [vmem:[%s571 + $0x10] sm:$0xff]
    %v575 = vld [vmem:[%s571 + $0x18] sm:$0xff]
    %v576 = vld [vmem:[%s571 + $0x20] sm:$0xff]
    %v577 = vld [vmem:[%s571 + $0x28] sm:$0xff]
    %v578 = vld [vmem:[%s571 + $0x30] sm:$0xff]
    %v579 = vld [vmem:[%s571 + $0x38] sm:$0xff]
    %v580 = vld [vmem:[%s571 + $0x40] sm:$0xff]
    %v581 = vld [vmem:[%s571 + $0x48] sm:$0xff]
    %v582 = vld [vmem:[%s571 + $0x50] sm:$0xff]
    %v583 = vld [vmem:[%s571 + $0x58] sm:$0xff]
    %v584 = vld [vmem:[%s571 + $0x60] sm:$0xff]
    %v585 = vld [vmem:[%s571 + $0x68] sm:$0xff]
    %v586 = vld [vmem:[%s571 + $0x70] sm:$0xff]
    %v587 = vld [vmem:[%s571 + $0x78] sm:$0xff]
    %v588 = vld [vmem:[%s571 + $0x80] sm:$0xff]
    %v589 = vld [vmem:[%s571 + $0x88] sm:$0xff]
    %v590 = vld [vmem:[%s571 + $0x90] sm:$0xff]
    %v591 = vld [vmem:[%s571 + $0x98] sm:$0xff]
    %v592 = vld [vmem:[%s571 + $0xa0] sm:$0xff]
    %v593 = vld [vmem:[%s571 + $0xa8] sm:$0xff]
    %v594 = vld [vmem:[%s571 + $0xb0] sm:$0xff]
    %v595 = vld [vmem:[%s571 + $0xb8] sm:$0xff]
    %v596 = vld [vmem:[%s571 + $0xc0] sm:$0xff]
    %v597 = vld [vmem:[%s571 + $0xc8] sm:$0xff]
    %v598 = vld [vmem:[%s571 + $0xd0] sm:$0xff]
    %v599 = vld [vmem:[%s571 + $0xd8] sm:$0xff]
    %v600 = vld [vmem:[%s571 + $0xe0] sm:$0xff]
    %v601 = vld [vmem:[%s571 + $0xe8] sm:$0xff]
    %v602 = vld [vmem:[%s571 + $0xf0] sm:$0xff]
    %v603 = vld [vmem:[%s571 + $0xf8] sm:$0xff]
    %v606 = vunpack.c.l.b16 %v569
    %v607 = vunpack.c.h.b16 %v569
    %v608 = vunpack.c.l.b16 %v570
    %v609 = vunpack.c.h.b16 %v570
    %v610 = vpack.c.b16 %v608, %v606
    %v611 = vpack.c.b16 %v609, %v607
    %v646 = vunpack.c.l.b16 %v572
    %v647 = vunpack.c.h.b16 %v572
    %v648 = vunpack.c.l.b16 %v573
    %v649 = vunpack.c.h.b16 %v573
    %v650 = vunpack.c.l.b16 %v574
    %v651 = vunpack.c.h.b16 %v574
    %v652 = vunpack.c.l.b16 %v575
    %v653 = vunpack.c.h.b16 %v575
    %v654 = vunpack.c.l.b16 %v576
    %v655 = vunpack.c.h.b16 %v576
    %v656 = vunpack.c.l.b16 %v577
    %v657 = vunpack.c.h.b16 %v577
    %v658 = vunpack.c.l.b16 %v578
    %v659 = vunpack.c.h.b16 %v578
    %v660 = vunpack.c.l.b16 %v579
    %v661 = vunpack.c.h.b16 %v579
    %v662 = vunpack.c.l.b16 %v580
    %v663 = vunpack.c.h.b16 %v580
    %v664 = vunpack.c.l.b16 %v581
    %v665 = vunpack.c.h.b16 %v581
    %v666 = vunpack.c.l.b16 %v582
    %v667 = vunpack.c.h.b16 %v582
    %v668 = vunpack.c.l.b16 %v583
    %v669 = vunpack.c.h.b16 %v583
    %v670 = vunpack.c.l.b16 %v584
    %v671 = vunpack.c.h.b16 %v584
    %v672 = vunpack.c.l.b16 %v585
    %v673 = vunpack.c.h.b16 %v585
    %v674 = vunpack.c.l.b16 %v586
    %v675 = vunpack.c.h.b16 %v586
    %v676 = vunpack.c.l.b16 %v587
    %v677 = vunpack.c.h.b16 %v587
    %v678 = vunpack.c.l.b16 %v588
    %v679 = vunpack.c.h.b16 %v588
    %v680 = vunpack.c.l.b16 %v589
    %v681 = vunpack.c.h.b16 %v589
    %v682 = vunpack.c.l.b16 %v590
    %v683 = vunpack.c.h.b16 %v590
    %v684 = vunpack.c.l.b16 %v591
    %v685 = vunpack.c.h.b16 %v591
    %v686 = vunpack.c.l.b16 %v592
    %v687 = vunpack.c.h.b16 %v592
    %v688 = vunpack.c.l.b16 %v593
    %v689 = vunpack.c.h.b16 %v593
    %v690 = vunpack.c.l.b16 %v594
    %v691 = vunpack.c.h.b16 %v594
    %v692 = vunpack.c.l.b16 %v595
    %v693 = vunpack.c.h.b16 %v595
    %v694 = vunpack.c.l.b16 %v596
    %v695 = vunpack.c.h.b16 %v596
    %v696 = vunpack.c.l.b16 %v597
    %v697 = vunpack.c.h.b16 %v597
    %v698 = vunpack.c.l.b16 %v598
    %v699 = vunpack.c.h.b16 %v598
    %v700 = vunpack.c.l.b16 %v599
    %v701 = vunpack.c.h.b16 %v599
    %v702 = vunpack.c.l.b16 %v600
    %v703 = vunpack.c.h.b16 %v600
    %v704 = vunpack.c.l.b16 %v601
    %v705 = vunpack.c.h.b16 %v601
    %v706 = vunpack.c.l.b16 %v602
    %v707 = vunpack.c.h.b16 %v602
    %v708 = vunpack.c.l.b16 %v603
    %v709 = vunpack.c.h.b16 %v603
    %v710 = vpack.c.b16 %v648, %v646
    %v711 = vpack.c.b16 %v649, %v647
    %v712 = vpack.c.b16 %v652, %v650
    %v713 = vpack.c.b16 %v653, %v651
    %v714 = vpack.c.b16 %v656, %v654
    %v715 = vpack.c.b16 %v657, %v655
    %v716 = vpack.c.b16 %v660, %v658
    %v717 = vpack.c.b16 %v661, %v659
    %v718 = vpack.c.b16 %v664, %v662
    %v719 = vpack.c.b16 %v665, %v663
    %v720 = vpack.c.b16 %v668, %v666
    %v721 = vpack.c.b16 %v669, %v667
    %v722 = vpack.c.b16 %v672, %v670
    %v723 = vpack.c.b16 %v673, %v671
    %v724 = vpack.c.b16 %v676, %v674
    %v725 = vpack.c.b16 %v677, %v675
    %v726 = vpack.c.b16 %v680, %v678
    %v727 = vpack.c.b16 %v681, %v679
    %v728 = vpack.c.b16 %v684, %v682
    %v729 = vpack.c.b16 %v685, %v683
    %v730 = vpack.c.b16 %v688, %v686
    %v731 = vpack.c.b16 %v689, %v687
    %v732 = vpack.c.b16 %v692, %v690
    %v733 = vpack.c.b16 %v693, %v691
    %v734 = vpack.c.b16 %v696, %v694
    %v735 = vpack.c.b16 %v697, %v695
    %v736 = vpack.c.b16 %v700, %v698
    %v737 = vpack.c.b16 %v701, %v699
    %v738 = vpack.c.b16 %v704, %v702
    %v739 = vpack.c.b16 %v705, %v703
    %v740 = vpack.c.b16 %v708, %v706
    %v741 = vpack.c.b16 %v709, %v707
    %774 = vmatprep.subr.bf16.mxu0 %v711
    %775 = vmatpush1.bf16.msra.mxu0 %v710
    %776 = vmatprep.subr.bf16.mxu0 %v713
    %777 = vmatpush1.bf16.msra.mxu0 %v712
    %778 = vmatprep.subr.bf16.mxu0 %v715
    %779 = vmatpush1.bf16.msra.mxu0 %v714
    %780 = vmatprep.subr.bf16.mxu0 %v717
    %781 = vmatpush1.bf16.msra.mxu0 %v716
    %782 = vmatprep.subr.bf16.mxu0 %v719
    %783 = vmatpush1.bf16.msra.mxu0 %v718
    %784 = vmatprep.subr.bf16.mxu0 %v721
    %785 = vmatpush1.bf16.msra.mxu0 %v720
    %786 = vmatprep.subr.bf16.mxu0 %v723
    %787 = vmatpush1.bf16.msra.mxu0 %v722
    %788 = vmatprep.subr.bf16.mxu0 %v725
    %789 = vmatpush1.bf16.msra.mxu0 %v724
    %790 = vmatprep.subr.bf16.mxu0 %v727
    %791 = vmatpush1.bf16.msra.mxu0 %v726
    %792 = vmatprep.subr.bf16.mxu0 %v729
    %793 = vmatpush1.bf16.msra.mxu0 %v728
    %794 = vmatprep.subr.bf16.mxu0 %v731
    %795 = vmatpush1.bf16.msra.mxu0 %v730
    %796 = vmatprep.subr.bf16.mxu0 %v733
    %797 = vmatpush1.bf16.msra.mxu0 %v732
    %798 = vmatprep.subr.bf16.mxu0 %v735
    %799 = vmatpush1.bf16.msra.mxu0 %v734
    %800 = vmatprep.subr.bf16.mxu0 %v737
    %801 = vmatpush1.bf16.msra.mxu0 %v736
    %802 = vmatprep.subr.bf16.mxu0 %v739
    %803 = vmatpush1.bf16.msra.mxu0 %v738
    %804 = vmatprep.subr.bf16.mxu0 %v741
    %805 = vmatpush1.bf16.msra.mxu0 %v740
    %806 = vmatprep.mubr.bf16.mxu0 %v611
    %807 = vmatmul.mubr.bf16.gmra.mrb[0].mxu0 %v610
    %v808 = vpop.f32.mrb[0].mxu0
    %v809 = vadd.f32 0.0, %v808
    %v810 = vpop.f32.mrb[0].mxu0
    %v811 = vadd.f32 0.0, %v810
    %v812 = vpop.f32.mrb[0].mxu0
    %v813 = vadd.f32 0.0, %v812
    %v814 = vpop.f32.mrb[0].mxu0
    %v815 = vadd.f32 0.0, %v814
    %816 = vdwg.mxu0
    %v817 = vadd.f32 %v809, %v813
    %v818 = vrot.slane %v817, 4
    %v819 = vadd.f32 %v817, %v818
    %v820 = vrot.slane %v819, 2
    %v821 = vadd.f32 %v819, %v820
    %v822 = vrot.slane %v821, 1
    %v823 = vadd.f32 %v821, %v822
    %v824 = vadd.f32 %v811, %v815
    %v825 = vrot.slane %v824, 4
    %v826 = vadd.f32 %v824, %v825
    %v827 = vrot.slane %v826, 2
    %v828 = vadd.f32 %v826, %v827
    %v829 = vrot.slane %v828, 1
    %v830 = vadd.f32 %v828, %v829
    %v831 = vmul.f32 %v809, %v809
    %v832 = vmul.f32 %v811, %v811
    %v833 = vmul.f32 %v813, %v813
    %v834 = vmul.f32 %v815, %v815
    %v835 = vadd.f32 %v831, %v833
    %v836 = vrot.slane %v835, 4
    %v837 = vadd.f32 %v835, %v836
    %v838 = vrot.slane %v837, 2
    %v839 = vadd.f32 %v837, %v838
    %v840 = vrot.slane %v839, 1
    %v841 = vadd.f32 %v839, %v840
    %v842 = vadd.f32 %v832, %v834
    %v843 = vrot.slane %v842, 4
    %v844 = vadd.f32 %v842, %v843
    %v845 = vrot.slane %v844, 2
    %v846 = vadd.f32 %v844, %v845
    %v847 = vrot.slane %v846, 1
    %v848 = vadd.f32 %v846, %v847
    %v849 = vmul.f32 %v823, 0.0625
    %v850 = vmul.f32 %v830, 0.0625
    %v851 = vmul.f32 %v841, 0.0625
    %v852 = vmul.f32 %v848, 0.0625
    %v853 = vmul.f32 %v849, %v849
    %v854 = vmul.f32 %v850, %v850
    %v855 = vsub.f32 %v851, %v853
    %v856 = vsub.f32 %v852, %v854
    %v857 = vsub.f32 %v809, %v849
    %v858 = vsub.f32 %v811, %v850
    %v859 = vsub.f32 %v813, %v849
    %v860 = vsub.f32 %v815, %v850
    %v861 = vadd.f32 %v855, 1e-05
    %v862 = vadd.f32 %v856, 1e-05
    %v863 = vrsqrt.pop %v861
    %v864 = vrsqrt.pop %v862
    %v865 = vmul.f32 %v857, %v863
    %v866 = vmul.f32 %v858, %v864
    %v867 = vmul.f32 %v859, %v863
    %v868 = vmul.f32 %v860, %v864
    %v869 = vlaneseq
    %v870 = vshrl.u32 %v869, 7
    %v871 = vsub.s32 2, %v870
    %v872 = vrot.slane %v34, %v871
    %v873 = vlaneseq
    %v874 = vshrl.u32 %v873, 7
    %v875 = vsub.s32 2, %v874
    %v876 = vrot.slane %v35, %v875
    %v877 = vmul.f32 %v865, %v872
    %v878 = vmul.f32 %v866, %v876
    %v879 = vmul.f32 %v867, %v872
    %v880 = vmul.f32 %v868, %v876
    %v881 = vlaneseq
    %v882 = vshrl.u32 %v881, 7
    %v883 = vsub.s32 3, %v882
    %v884 = vrot.slane %v34, %v883
    %v885 = vlaneseq
    %v886 = vshrl.u32 %v885, 7
    %v887 = vsub.s32 3, %v886
    %v888 = vrot.slane %v35, %v887
    %v889 = vadd.f32 %v877, %v884
    %v890 = vadd.f32 %v878, %v888
    %v891 = vadd.f32 %v879, %v884
    %v892 = vadd.f32 %v880, %v888
    %v893 = vmax.f32 %v889, 0.0
    %v894 = vmax.f32 %v890, 0.0
    %v895 = vmax.f32 %v891, 0.0
    %v896 = vmax.f32 %v892, 0.0
    %s897 = scalar_lea.vmem %s2, 128
    %v898 = vld [vmem:[%s897] sm:$0xf]
    %v899 = vld [vmem:[%s897 + $0x4] sm:$0xf]
    %v900 = vld [vmem:[%s897 + $0x8] sm:$0xf]
    %v901 = vld [vmem:[%s897 + $0xc] sm:$0xf]
    %v902 = vld [vmem:[%s897 + $0x10] sm:$0xf]
    %v903 = vld [vmem:[%s897 + $0x14] sm:$0xf]
    %v904 = vld [vmem:[%s897 + $0x18] sm:$0xf]
    %v905 = vld [vmem:[%s897 + $0x1c] sm:$0xf]
    %v906 = vld [vmem:[%s897 + $0x20] sm:$0xf]
    %v907 = vld [vmem:[%s897 + $0x24] sm:$0xf]
    %v908 = vld [vmem:[%s897 + $0x28] sm:$0xf]
    %v909 = vld [vmem:[%s897 + $0x2c] sm:$0xf]
    %v910 = vld [vmem:[%s897 + $0x30] sm:$0xf]
    %v911 = vld [vmem:[%s897 + $0x34] sm:$0xf]
    %v912 = vld [vmem:[%s897 + $0x38] sm:$0xf]
    %v913 = vld [vmem:[%s897 + $0x3c] sm:$0xf]
    %v914 = vld [vmem:[%s897 + $0x40] sm:$0xf]
    %v915 = vld [vmem:[%s897 + $0x44] sm:$0xf]
    %v916 = vld [vmem:[%s897 + $0x48] sm:$0xf]
    %v917 = vld [vmem:[%s897 + $0x4c] sm:$0xf]
    %v918 = vld [vmem:[%s897 + $0x50] sm:$0xf]
    %v919 = vld [vmem:[%s897 + $0x54] sm:$0xf]
    %v920 = vld [vmem:[%s897 + $0x58] sm:$0xf]
    %v921 = vld [vmem:[%s897 + $0x5c] sm:$0xf]
    %v922 = vld [vmem:[%s897 + $0x60] sm:$0xf]
    %v923 = vld [vmem:[%s897 + $0x64] sm:$0xf]
    %v924 = vld [vmem:[%s897 + $0x68] sm:$0xf]
    %v925 = vld [vmem:[%s897 + $0x6c] sm:$0xf]
    %v926 = vld [vmem:[%s897 + $0x70] sm:$0xf]
    %v927 = vld [vmem:[%s897 + $0x74] sm:$0xf]
    %v928 = vld [vmem:[%s897 + $0x78] sm:$0xf]
    %v929 = vld [vmem:[%s897 + $0x7c] sm:$0xf]
    %v930 = vunpack.c.l.bf16 %v898
    %v931 = vunpack.c.l.bf16 %v899
    %v932 = vunpack.c.l.bf16 %v900
    %v933 = vunpack.c.l.bf16 %v901
    %v934 = vunpack.c.l.bf16 %v902
    %v935 = vunpack.c.l.bf16 %v903
    %v936 = vunpack.c.l.bf16 %v904
    %v937 = vunpack.c.l.bf16 %v905
    %v938 = vunpack.c.l.bf16 %v906
    %v939 = vunpack.c.l.bf16 %v907
    %v940 = vunpack.c.l.bf16 %v908
    %v941 = vunpack.c.l.bf16 %v909
    %v942 = vunpack.c.l.bf16 %v910
    %v943 = vunpack.c.l.bf16 %v911
    %v944 = vunpack.c.l.bf16 %v912
    %v945 = vunpack.c.l.bf16 %v913
    %v946 = vunpack.c.l.bf16 %v914
    %v947 = vunpack.c.l.bf16 %v915
    %v948 = vunpack.c.l.bf16 %v916
    %v949 = vunpack.c.l.bf16 %v917
    %v950 = vunpack.c.l.bf16 %v918
    %v951 = vunpack.c.l.bf16 %v919
    %v952 = vunpack.c.l.bf16 %v920
    %v953 = vunpack.c.l.bf16 %v921
    %v954 = vunpack.c.l.bf16 %v922
    %v955 = vunpack.c.l.bf16 %v923
    %v956 = vunpack.c.l.bf16 %v924
    %v957 = vunpack.c.l.bf16 %v925
    %v958 = vunpack.c.l.bf16 %v926
    %v959 = vunpack.c.l.bf16 %v927
    %v960 = vunpack.c.l.bf16 %v928
    %v961 = vunpack.c.l.bf16 %v929
    %962 = vmatprep.subr.mxu0 0.0
    %963 = vmatpush1.msra.mxu0 %v930
    %964 = vmatprep.subr.mxu0 0.0
    %965 = vmatpush1.msra.mxu0 %v931
    %966 = vmatprep.subr.mxu0 0.0
    %967 = vmatpush1.msra.mxu0 %v932
    %968 = vmatprep.subr.mxu0 0.0
    %969 = vmatpush1.msra.mxu0 %v933
    %970 = vmatprep.subr.mxu0 0.0
    %971 = vmatpush1.msra.mxu0 %v934
    %972 = vmatprep.subr.mxu0 0.0
    %973 = vmatpush1.msra.mxu0 %v935
    %974 = vmatprep.subr.mxu0 0.0
    %975 = vmatpush1.msra.mxu0 %v936
    %976 = vmatprep.subr.mxu0 0.0
    %977 = vmatpush1.msra.mxu0 %v937
    %978 = vmatprep.subr.mxu0 0.0
    %979 = vmatpush1.msra.mxu0 %v938
    %980 = vmatprep.subr.mxu0 0.0
    %981 = vmatpush1.msra.mxu0 %v939
    %982 = vmatprep.subr.mxu0 0.0
    %983 = vmatpush1.msra.mxu0 %v940
    %984 = vmatprep.subr.mxu0 0.0
    %985 = vmatpush1.msra.mxu0 %v941
    %986 = vmatprep.subr.mxu0 0.0
    %987 = vmatpush1.msra.mxu0 %v942
    %988 = vmatprep.subr.mxu0 0.0
    %989 = vmatpush1.msra.mxu0 %v943
    %990 = vmatprep.subr.mxu0 0.0
    %991 = vmatpush1.msra.mxu0 %v944
    %992 = vmatprep.subr.mxu0 0.0
    %993 = vmatpush1.msra.mxu0 %v945
    %994 = vmatprep.subr.mxu0 0.0
    %995 = vmatpush1.msra.mxu0 %v946
    %996 = vmatprep.subr.mxu0 0.0
    %997 = vmatpush1.msra.mxu0 %v947
    %998 = vmatprep.subr.mxu0 0.0
    %999 = vmatpush1.msra.mxu0 %v948
    %1000 = vmatprep.subr.mxu0 0.0
    %1001 = vmatpush1.msra.mxu0 %v949
    %1002 = vmatprep.subr.mxu0 0.0
    %1003 = vmatpush1.msra.mxu0 %v950
    %1004 = vmatprep.subr.mxu0 0.0
    %1005 = vmatpush1.msra.mxu0 %v951
    %1006 = vmatprep.subr.mxu0 0.0
    %1007 = vmatpush1.msra.mxu0 %v952
    %1008 = vmatprep.subr.mxu0 0.0
    %1009 = vmatpush1.msra.mxu0 %v953
    %1010 = vmatprep.subr.mxu0 0.0
    %1011 = vmatpush1.msra.mxu0 %v954
    %1012 = vmatprep.subr.mxu0 0.0
    %1013 = vmatpush1.msra.mxu0 %v955
    %1014 = vmatprep.subr.mxu0 0.0
    %1015 = vmatpush1.msra.mxu0 %v956
    %1016 = vmatprep.subr.mxu0 0.0
    %1017 = vmatpush1.msra.mxu0 %v957
    %1018 = vmatprep.subr.mxu0 0.0
    %1019 = vmatpush1.msra.mxu0 %v958
    %1020 = vmatprep.subr.mxu0 0.0
    %1021 = vmatpush1.msra.mxu0 %v959
    %1022 = vmatprep.subr.mxu0 0.0
    %1023 = vmatpush1.msra.mxu0 %v960
    %1024 = vmatprep.subr.mxu0 0.0
    %1025 = vmatpush1.msra.mxu0 %v961
    %1026 = vmatprep.mubr.f32.mxu0 %v894
    %1027 = vmatmul.mubr.f32.gmra.mrb[0].mxu0 %v893
    %v1028 = vpop.f32.mrb[0].mxu0
    %v1029 = vadd.f32 0.0, %v1028
    %v1030 = vpop.f32.mrb[0].mxu0
    %1031 = vmatprep.mubr.f32.mxu0 %v896
    %1032 = vmatmul.mubr.f32.gmra.mrb[0].mxu0 %v895
    %v1033 = vpop.f32.mrb[0].mxu0
    %v1034 = vadd.f32 0.0, %v1033
    %v1035 = vpop.f32.mrb[0].mxu0
    %1036 = vdwg.mxu0
    %v1037 = vsel %vm503, %v1029, 0.0
    %v1038 = vsel %vm503, %v1034, 0.0
    %v1039 = vadd.f32 %v1037, %v1038
    %v1040 = vrot.slane %v1039, 4
    %v1041 = vadd.f32 %v1039, %v1040
    %v1042 = vrot.slane %v1041, 2
    %v1043 = vadd.f32 %v1041, %v1042
    %v1044 = vrot.slane %v1043, 1
    %v1045 = vadd.f32 %v1043, %v1044
    %v1046 = vmul.f32 %v1029, %v1029
    %v1047 = vmul.f32 %v1034, %v1034
    %v1048 = vsel %vm503, %v1046, 0.0
    %v1049 = vsel %vm503, %v1047, 0.0
    %v1050 = vadd.f32 %v1048, %v1049
    %v1051 = vrot.slane %v1050, 4
    %v1052 = vadd.f32 %v1050, %v1051
    %v1053 = vrot.slane %v1052, 2
    %v1054 = vadd.f32 %v1052, %v1053
    %v1055 = vrot.slane %v1054, 1
    %v1056 = vadd.f32 %v1054, %v1055
    %v1057 = vmul.f32 %v1045, 0.0625
    %v1058 = vmul.f32 %v1056, 0.0625
    %v1059 = vmul.f32 %v1057, %v1057
    %v1060 = vsub.f32 %v1058, %v1059
    %v1061 = vsub.f32 %v1029, %v1057
    %v1062 = vsub.f32 %v1034, %v1057
    %v1063 = vadd.f32 %v1060, 1e-05
    %v1064 = vrsqrt.pop %v1063
    %v1065 = vmul.f32 %v1061, %v1064
    %v1066 = vmul.f32 %v1062, %v1064
    %v1067 = vlaneseq
    %v1068 = vshrl.u32 %v1067, 7
    %v1069 = vsub.s32 6, %v1068
    %v1070 = vrot.slane %v34, %v1069
    %v1071 = vmul.f32 %v1065, %v1070
    %v1072 = vmul.f32 %v1066, %v1070
    %v1073 = vlaneseq
    %v1074 = vshrl.u32 %v1073, 7
    %v1075 = vsub.s32 7, %v1074
    %v1076 = vrot.slane %v34, %v1075
    %v1077 = vadd.f32 %v1071, %v1076
    %v1078 = vadd.f32 %v1072, %v1076
    %v1079 = vsel %vm503, %v1077, -inf
    %1080 = vmax.xlane.f32.xlu0 %v1079
    %v1081 = vpop.xlane.xlu0 %1080
    %v1082 = vsel %vm503, %v1078, -inf
    %1083 = vmax.xlane.f32.xlu0 %v1082
    %v1084 = vpop.xlane.xlu0 %1083
    %v1085 = vsub.f32 %v1077, %v1081
    %v1086 = vsub.f32 %v1078, %v1084
    %v1087 = vmul.f32 %v1085, 1.442695
    %v1088 = vpow.pop %v1087
    %v1089 = vmul.f32 %v1086, 1.442695
    %v1090 = vpow.pop %v1089
    %v1091 = vsel %vm503, %v1088, 0.0
    %1092 = vadd.xlane.f32.xlu0 %v1091
    %v1093 = vpop.xlane.xlu0 %1092
    %v1094 = vsel %vm503, %v1090, 0.0
    %1095 = vadd.xlane.f32.xlu0 %v1094
    %v1096 = vpop.xlane.xlu0 %1095
    %v1097 = vrcp.pop %v1093
    %v1098 = vrcp.pop %v1096
    %v1099 = vmul.f32 %v1088, %v1097
    %v1100 = vmul.f32 %v1090, %v1098
    %1103 = vrot.lane.b32.xlu0 %v1099, 10
    %v1104 = vpop.permute.xlu0 %1103
    %1105 = vrot.lane.b32.xlu0 %v1100, 10
    %v1106 = vpop.permute.xlu0 %1105
    %v1109 = vsel %vm503, %v566, %v1104
    %v1110 = vsel %vm503, %v567, %v1106
    %v1111 = vld [vmem:[%s3] sm:$0xff]
    %v1112 = vld [vmem:[%s3 + $0x8] sm:$0xff]
    %v1113 = vld [vmem:[%s3 + $0x10] sm:$0xf]
    %vm1114 = vcmask 162816
    %v1116 = vsel %vm1114, %v1109, 0
    %v1119 = vsel %vm1114, %v1110, 0
    %vm1121 = vcmask 1043456
    %v1123 = vsel %vm1121, %v1113, 0
    %1125 = vmatprep.subr.mxu0 0.0
    %1126 = vmatpush1.msra.mxu0 %v1111
    %1127 = vmatprep.subr.mxu0 0.0
    %1128 = vmatpush1.msra.mxu0 %v1112
    %1129 = vmatprep.subr.mxu0 0.0
    %1130 = vmatpush1.msra.mxu0 %v1123
    %1131 = vmatprep.subr.mxu0 0.0
    %1132 = vmatpush1.msra.mxu0 0.0
    %1133 = vmatprep.subr.mxu0 0.0
    %1134 = vmatpush1.msra.mxu0 0.0
    %1135 = vmatprep.subr.mxu0 0.0
    %1136 = vmatpush1.msra.mxu0 0.0
    %1137 = vmatprep.subr.mxu0 0.0
    %1138 = vmatpush1.msra.mxu0 0.0
    %1139 = vmatprep.subr.mxu0 0.0
    %1140 = vmatpush1.msra.mxu0 0.0
    %1141 = vmatprep.subr.mxu0 0.0
    %1142 = vmatpush1.msra.mxu0 0.0
    %1143 = vmatprep.subr.mxu0 0.0
    %1144 = vmatpush1.msra.mxu0 0.0
    %1145 = vmatprep.subr.mxu0 0.0
    %1146 = vmatpush1.msra.mxu0 0.0
    %1147 = vmatprep.subr.mxu0 0.0
    %1148 = vmatpush1.msra.mxu0 0.0
    %1149 = vmatprep.subr.mxu0 0.0
    %1150 = vmatpush1.msra.mxu0 0.0
    %1151 = vmatprep.subr.mxu0 0.0
    %1152 = vmatpush1.msra.mxu0 0.0
    %1153 = vmatprep.subr.mxu0 0.0
    %1154 = vmatpush1.msra.mxu0 0.0
    %1155 = vmatprep.subr.mxu0 0.0
    %1156 = vmatpush1.msra.mxu0 0.0
    %1157 = vmatprep.subr.mxu0 0.0
    %1158 = vmatpush1.msra.mxu0 0.0
    %1159 = vmatprep.subr.mxu0 0.0
    %1160 = vmatpush1.msra.mxu0 0.0
    %1161 = vmatprep.subr.mxu0 0.0
    %1162 = vmatpush1.msra.mxu0 0.0
    %1163 = vmatprep.subr.mxu0 0.0
    %1164 = vmatpush1.msra.mxu0 0.0
    %1165 = vmatprep.subr.mxu0 0.0
    %1166 = vmatpush1.msra.mxu0 0.0
    %1167 = vmatprep.subr.mxu0 0.0
    %1168 = vmatpush1.msra.mxu0 0.0
    %1169 = vmatprep.subr.mxu0 0.0
    %1170 = vmatpush1.msra.mxu0 0.0
    %1171 = vmatprep.subr.mxu0 0.0
    %1172 = vmatpush1.msra.mxu0 0.0
    %1173 = vmatprep.subr.mxu0 0.0
    %1174 = vmatpush1.msra.mxu0 0.0
    %1175 = vmatprep.subr.mxu0 0.0
    %1176 = vmatpush1.msra.mxu0 0.0
    %1177 = vmatprep.subr.mxu0 0.0
    %1178 = vmatpush1.msra.mxu0 0.0
    %1179 = vmatprep.subr.mxu0 0.0
    %1180 = vmatpush1.msra.mxu0 0.0
    %1181 = vmatprep.subr.mxu0 0.0
    %1182 = vmatpush1.msra.mxu0 0.0
    %1183 = vmatprep.subr.mxu0 0.0
    %1184 = vmatpush1.msra.mxu0 0.0
    %1185 = vmatprep.subr.mxu0 0.0
    %1186 = vmatpush1.msra.mxu0 0.0
    %1187 = vmatprep.subr.mxu0 0.0
    %1188 = vmatpush1.msra.mxu0 0.0
    %1189 = vmatprep.mubr.f32.mxu0 0.0
    %1190 = vmatmul.mubr.f32.gmra.mrb[0].mxu0 %v1116
    %v1191 = vpop.f32.mrb[0].mxu0
    %v1192 = vadd.f32 0.0, %v1191
    %v1193 = vpop.f32.mrb[0].mxu0
    %1194 = vmatprep.mubr.f32.mxu0 0.0
    %1195 = vmatmul.mubr.f32.gmra.mrb[0].mxu0 %v1119
    %v1196 = vpop.f32.mrb[0].mxu0
    %v1197 = vadd.f32 0.0, %v1196
    %v1198 = vpop.f32.mrb[0].mxu0
    %1199 = vdwg.mxu0
    %vm1200 = vcmask 15360
    %v1201 = vsel %vm1200, %v1192, 0.0
    %v1202 = vsel %vm1200, %v1197, 0.0
    %v1203 = vadd.f32 %v1201, %v1202
    %v1204 = vrot.slane %v1203, 4
    %v1205 = vadd.f32 %v1203, %v1204
    %v1206 = vrot.slane %v1205, 2
    %v1207 = vadd.f32 %v1205, %v1206
    %v1208 = vrot.slane %v1207, 1
    %v1209 = vadd.f32 %v1207, %v1208
    %v1210 = vmul.f32 %v1192, %v1192
    %v1211 = vmul.f32 %v1197, %v1197
    %v1212 = vsel %vm1200, %v1210, 0.0
    %v1213 = vsel %vm1200, %v1211, 0.0
    %v1214 = vadd.f32 %v1212, %v1213
    %v1215 = vrot.slane %v1214, 4
    %v1216 = vadd.f32 %v1214, %v1215
    %v1217 = vrot.slane %v1216, 2
    %v1218 = vadd.f32 %v1216, %v1217
    %v1219 = vrot.slane %v1218, 1
    %v1220 = vadd.f32 %v1218, %v1219
    %v1221 = vmul.f32 %v1209, 0.0625
    %v1222 = vmul.f32 %v1220, 0.0625
    %v1223 = vmul.f32 %v1221, %v1221
    %v1224 = vsub.f32 %v1222, %v1223
    %v1225 = vsub.f32 %v1192, %v1221
    %v1226 = vsub.f32 %v1197, %v1221
    %v1227 = vadd.f32 %v1224, 1e-05
    %v1228 = vrsqrt.pop %v1227
    %v1229 = vmul.f32 %v1225, %v1228
    %v1230 = vmul.f32 %v1226, %v1228
    %v1231 = vlaneseq
    %v1232 = vshrl.u32 %v1231, 7
    %v1233 = vsub.s32 0, %v1232
    %v1234 = vrot.slane %v36, %v1233
    %v1235 = vmul.f32 %v1229, %v1234
    %v1236 = vmul.f32 %v1230, %v1234
    %v1237 = vlaneseq
    %v1238 = vshrl.u32 %v1237, 7
    %v1239 = vsub.s32 1, %v1238
    %v1240 = vrot.slane %v36, %v1239
    %v1241 = vadd.f32 %v1235, %v1240
    %v1242 = vadd.f32 %v1236, %v1240
    %v1243 = vsel %vm1200, %v1241, -inf
    %1244 = vmax.xlane.f32.xlu0 %v1243
    %v1245 = vpop.xlane.xlu0 %1244
    %v1246 = vsel %vm1200, %v1242, -inf
    %1247 = vmax.xlane.f32.xlu0 %v1246
    %v1248 = vpop.xlane.xlu0 %1247
    %v1249 = vsub.f32 %v1241, %v1245
    %v1250 = vsub.f32 %v1242, %v1248
    %v1251 = vmul.f32 %v1249, 1.442695
    %v1252 = vpow.pop %v1251
    %v1253 = vmul.f32 %v1250, 1.442695
    %v1254 = vpow.pop %v1253
    %v1255 = vsel %vm1200, %v1252, 0.0
    %1256 = vadd.xlane.f32.xlu0 %v1255
    %v1257 = vpop.xlane.xlu0 %1256
    %v1258 = vsel %vm1200, %v1254, 0.0
    %1259 = vadd.xlane.f32.xlu0 %v1258
    %v1260 = vpop.xlane.xlu0 %1259
    %v1261 = vrcp.pop %v1257
    %v1262 = vrcp.pop %v1260
    %v1263 = vmul.f32 %v1252, %v1261
    %v1264 = vmul.f32 %v1254, %v1262
    %1265 = vst.msk [vmem:[%s5] sm:$0xff] %vm1200, %v1263
    %1266 = vst.msk [vmem:[%s5 + $0x8] sm:$0xff] %vm1200, %v1264
    // Predicated region
    $region26: #{tpu_custom_call.1} parent=1 // pred_check
      _
    $region27: #{tpu_custom_call.1} parent=1 // pred_check_branch
      %1268 = sbr.rel (0) target = $region29
    $region28: #{tpu_custom_call.1} parent=1 // pred_region
      _
    $region29: #{tpu_custom_call.1} parent=1 // pred_fallthru
      _
    // Predicated region
    $region30: #{tpu_custom_call.1} parent=1 // pred_check
      _
    $region31: #{tpu_custom_call.1} parent=1 // pred_check_branch
      %1270 = sbr.rel (0) target = $region33
    $region32: #{tpu_custom_call.1} parent=1 // pred_region
      _
    $region33: #{tpu_custom_call.1} parent=1 // pred_fallthru
      _
    %1271 = vsyncpa [#allocation3], 1

</llo_original>
